<compile_context>
chip_gen: v6e
topology: v6e:2x2x1
jax: 0.10.0
libtpu: 0.0.40
codegen_flags: <defaults>
</compile_context>

<pallas_src>
import functools

import jax
import jax.numpy as jnp
from jax.experimental import pallas as pl
from jax.experimental.pallas import tpu as pltpu

N_LAYERS = 4
LANES = 128


# ----------------------------- Pallas kernel --------------------------------
def _gcn_net_kernel(a_ref, x_ref, w_ref, b_ref, o_ref):
    """Fused 4-layer GCN forward; whole problem resident in VMEM.

    a_ref : (Np, Np)     bf16  normalized adjacency
    x_ref : (Np, Cp)     bf16  node features (lane-dense, Cp multiple of 128)
    w_ref : (4, Cp, Cp)  bf16  stacked, zero-padded layer weights
    b_ref : (4, 1, Cp)   f32   stacked, zero-padded biases
    o_ref : (Np, Cp)     f32
    """
    a = a_ref[...]
    h = x_ref[...]                       # bf16 activations between layers
    for li in range(N_LAYERS):           # statically unrolled
        w = w_ref[li]                    # (Cp, Cp)
        b = b_ref[li]                    # (1, Cp)
        hw = jnp.dot(h, w, preferred_element_type=jnp.float32)
        acc = jnp.dot(a, hw.astype(jnp.bfloat16),
                      preferred_element_type=jnp.float32) + b
        if li < N_LAYERS - 1:
            h = jnp.maximum(acc, 0.0).astype(jnp.bfloat16)   # ReLU
        else:
            o_ref[...] = acc             # final layer: no ReLU, f32 store


# ------------------------------ JAX glue -------------------------------------
def _round_up(v, m):
    return ((v + m - 1) // m) * m


def _pad2d(x, rows, cols):
    return jnp.pad(x, ((0, rows - x.shape[0]), (0, cols - x.shape[1])))


def build_norm_adj(edge_index, num_nodes):
    """Dense D^{-1/2} (A + I) D^{-1/2} from a (2, E) int edge_index (src, dst).

    Matches PyG gcn_norm on an unweighted graph: duplicate edges sum, and each
    node gets exactly one weight-1 self-loop (existing self-loops replaced).
    """
    src = edge_index[0]
    dst = edge_index[1]
    a = jnp.zeros((num_nodes, num_nodes), jnp.float32).at[dst, src].add(1.0)
    eye = jnp.eye(num_nodes, dtype=jnp.float32)
    a = a * (1.0 - eye) + eye
    deg = a.sum(axis=1)
    d_inv_sqrt = jnp.where(deg > 0, jax.lax.rsqrt(deg), 0.0)
    return a * d_inv_sqrt[:, None] * d_inv_sqrt[None, :]


def glorot(key, shape):
    fan_in, fan_out = shape
    limit = jnp.sqrt(6.0 / (fan_in + fan_out))
    return jax.random.uniform(key, shape, jnp.float32, -limit, limit)


def init_params(key, num_feature):
    dims = [num_feature, 128, 64, 32, 16]
    params = []
    for li in range(N_LAYERS):
        key, wk = jax.random.split(key)
        w = glorot(wk, (dims[li], dims[li + 1]))
        b = jnp.zeros((dims[li + 1],), jnp.float32)
        params.append((w, b))
    return params


def prepare_params(params, num_feature):
    """One-time prep: pad/cast/stack weights & biases (hoisted out of forward)."""
    assert len(params) == N_LAYERS
    cp = max(LANES, _round_up(num_feature, LANES))   # lane-dense channel width
    ws = [_pad2d(w, cp, cp).astype(jnp.bfloat16) for (w, _) in params]
    bs = [jnp.pad(b, (0, cp - b.shape[0])).reshape(1, cp).astype(jnp.float32)
          for (_, b) in params]
    w_stack = jnp.stack(ws)              # (4, cp, cp) bf16
    b_stack = jnp.stack(bs)              # (4, 1, cp)  f32
    c_out = params[-1][0].shape[1]       # true output width (16)
    return w_stack, b_stack, c_out


@functools.partial(jax.jit, static_argnames=("c_out",))
def net_forward(x, a_norm, w_stack, b_stack, *, c_out):
    """Net.forward: conv1->relu->conv2->relu->conv3->relu->conv4 (no final relu)."""
    n = x.shape[0]
    cp = w_stack.shape[-1]
    n_pad = _round_up(n, 16)             # bf16 sublane pack: 16-row alignment

    a_p = _pad2d(a_norm, n_pad, n_pad).astype(jnp.bfloat16)
    x_p = _pad2d(x, n_pad, cp).astype(jnp.bfloat16)

    vmem = pl.BlockSpec(memory_space=pltpu.MemorySpace.VMEM)
    out = pl.pallas_call(
        _gcn_net_kernel,
        in_specs=[vmem, vmem, vmem, vmem],
        out_specs=vmem,
        out_shape=jax.ShapeDtypeStruct((n_pad, cp), jnp.float32),
    )(a_p, x_p, w_stack, b_stack)

    return out[:n, :c_out]


def net_forward_ref(x, a_norm, params):
    """Pure-JAX f32 reference of Net.forward (for verification)."""
    h = x
    for idx, (w, b) in enumerate(params):
        h = a_norm @ (h @ w) + b[None, :]
        if idx < len(params) - 1:
            h = jnp.maximum(h, 0.0)
    return h


# -------------------------------- main ----------------------------------------
if __name__ == "__main__":
    NUM_NODE = 32      # small synthetic graph
    NUM_FEATURE = 32
    NUM_EDGE = 40

    key = jax.random.PRNGKey(0)
    kx, ke, kp = jax.random.split(key, 3)

    # node features
    x = jax.random.normal(kx, (NUM_NODE, NUM_FEATURE), jnp.float32)

    # random directed edges, symmetrized (mirrors pos_edge_index cat with [1,0] swap)
    e = jax.random.randint(ke, (2, NUM_EDGE), 0, NUM_NODE, jnp.int32)
    edge_index = jnp.concatenate([e, e[::-1]], axis=-1)  # (2, 2*NUM_EDGE)

    a_norm = build_norm_adj(edge_index, NUM_NODE)
    params = init_params(kp, NUM_FEATURE)

    # One-time param prep (padding / bf16 cast / stacking) -- NOT on the hot path.
    w_stack, b_stack, c_out = prepare_params(params, NUM_FEATURE)
    w_stack = jax.block_until_ready(w_stack)
    b_stack = jax.block_until_ready(b_stack)

    z = net_forward(x, a_norm, w_stack, b_stack, c_out=c_out)
    z = jax.block_until_ready(z)
    assert z.shape == (NUM_NODE, 16) and z.dtype == jnp.float32

    # Numerical sanity vs. f32 reference (bf16 storage => lenient tolerance).
    z_ref = net_forward_ref(x, a_norm, params)
    max_err = float(jnp.max(jnp.abs(z - z_ref)))
    assert max_err < 0.3, f"max abs error {max_err} too large"

    print("KERNEL_OK")
</pallas_src>

<mosaic_0001>
module attributes {stable_mosaic.version = 11 : i64} {
  func.func @_gcn_net_kernel(%arg0: memref<32x32xbf16, #tpu.memory_space<vmem>>, %arg1: memref<32x128xbf16, #tpu.memory_space<vmem>>, %arg2: memref<4x128x128xbf16, #tpu.memory_space<vmem>>, %arg3: memref<4x1x128xf32, #tpu.memory_space<vmem>>, %arg4: memref<32x128xf32, #tpu.memory_space<vmem>>) attributes {dimension_semantics = [], scalar_prefetch = 0 : i64, scratch_operands = 0 : i64, tpu.core_type = #tpu.core_type<tc>} {
    %c0 = arith.constant 0 : index
    %c0_0 = arith.constant 0 : index
    %0 = vector.load %arg0[%c0, %c0_0] : memref<32x32xbf16, #tpu.memory_space<vmem>>, vector<32x32xbf16>
    %c0_1 = arith.constant 0 : index
    %c0_2 = arith.constant 0 : index
    %1 = vector.load %arg1[%c0_1, %c0_2] : memref<32x128xbf16, #tpu.memory_space<vmem>>, vector<32x128xbf16>
    %c0_3 = arith.constant 0 : index
    %c0_4 = arith.constant 0 : index
    %c0_5 = arith.constant 0 : index
    %2 = vector.load %arg2[%c0_3, %c0_4, %c0_5] : memref<4x128x128xbf16, #tpu.memory_space<vmem>>, vector<1x128x128xbf16>
    %3 = vector.shape_cast %2 : vector<1x128x128xbf16> to vector<128x128xbf16>
    %c0_6 = arith.constant 0 : index
    %c0_7 = arith.constant 0 : index
    %c0_8 = arith.constant 0 : index
    %4 = vector.load %arg3[%c0_6, %c0_7, %c0_8] : memref<4x1x128xf32, #tpu.memory_space<vmem>>, vector<1x1x128xf32>
    %5 = vector.shape_cast %4 : vector<1x1x128xf32> to vector<1x128xf32>
    %cst = arith.constant dense<0.000000e+00> : vector<32x128xf32>
    %6 = tpu.matmul %1, %3, %cst {dimension_numbers = #tpu.dot_dimension_numbers<[1], [0], [0], [1], [0, 0, 1, 1], [], []>} : vector<32x128xbf16>, vector<128x128xbf16>, vector<32x128xf32> -> vector<32x128xf32>
    %7 = arith.truncf %6 : vector<32x128xf32> to vector<32x128xbf16>
    %cst_9 = arith.constant dense<0.000000e+00> : vector<32x128xf32>
    %8 = tpu.matmul %0, %7, %cst_9 {dimension_numbers = #tpu.dot_dimension_numbers<[1], [0], [0], [1], [0, 0, 1, 1], [], []>} : vector<32x32xbf16>, vector<32x128xbf16>, vector<32x128xf32> -> vector<32x128xf32>
    %9 = vector.broadcast %5 : vector<1x128xf32> to vector<32x128xf32>
    %10 = arith.addf %8, %9 : vector<32x128xf32>
    %cst_10 = arith.constant 0.000000e+00 : f32
    %11 = vector.broadcast %cst_10 : f32 to vector<32x128xf32>
    %12 = arith.maximumf %10, %11 : vector<32x128xf32>
    %13 = arith.truncf %12 : vector<32x128xf32> to vector<32x128xbf16>
    %c1 = arith.constant 1 : index
    %c0_11 = arith.constant 0 : index
    %c0_12 = arith.constant 0 : index
    %14 = vector.load %arg2[%c1, %c0_11, %c0_12] : memref<4x128x128xbf16, #tpu.memory_space<vmem>>, vector<1x128x128xbf16>
    %15 = vector.shape_cast %14 : vector<1x128x128xbf16> to vector<128x128xbf16>
    %c1_13 = arith.constant 1 : index
    %c0_14 = arith.constant 0 : index
    %c0_15 = arith.constant 0 : index
    %16 = vector.load %arg3[%c1_13, %c0_14, %c0_15] : memref<4x1x128xf32, #tpu.memory_space<vmem>>, vector<1x1x128xf32>
    %17 = vector.shape_cast %16 : vector<1x1x128xf32> to vector<1x128xf32>
    %cst_16 = arith.constant dense<0.000000e+00> : vector<32x128xf32>
    %18 = tpu.matmul %13, %15, %cst_16 {dimension_numbers = #tpu.dot_dimension_numbers<[1], [0], [0], [1], [0, 0, 1, 1], [], []>} : vector<32x128xbf16>, vector<128x128xbf16>, vector<32x128xf32> -> vector<32x128xf32>
    %19 = arith.truncf %18 : vector<32x128xf32> to vector<32x128xbf16>
    %cst_17 = arith.constant dense<0.000000e+00> : vector<32x128xf32>
    %20 = tpu.matmul %0, %19, %cst_17 {dimension_numbers = #tpu.dot_dimension_numbers<[1], [0], [0], [1], [0, 0, 1, 1], [], []>} : vector<32x32xbf16>, vector<32x128xbf16>, vector<32x128xf32> -> vector<32x128xf32>
    %21 = vector.broadcast %17 : vector<1x128xf32> to vector<32x128xf32>
    %22 = arith.addf %20, %21 : vector<32x128xf32>
    %cst_18 = arith.constant 0.000000e+00 : f32
    %23 = vector.broadcast %cst_18 : f32 to vector<32x128xf32>
    %24 = arith.maximumf %22, %23 : vector<32x128xf32>
    %25 = arith.truncf %24 : vector<32x128xf32> to vector<32x128xbf16>
    %c2 = arith.constant 2 : index
    %c0_19 = arith.constant 0 : index
    %c0_20 = arith.constant 0 : index
    %26 = vector.load %arg2[%c2, %c0_19, %c0_20] : memref<4x128x128xbf16, #tpu.memory_space<vmem>>, vector<1x128x128xbf16>
    %27 = vector.shape_cast %26 : vector<1x128x128xbf16> to vector<128x128xbf16>
    %c2_21 = arith.constant 2 : index
    %c0_22 = arith.constant 0 : index
    %c0_23 = arith.constant 0 : index
    %28 = vector.load %arg3[%c2_21, %c0_22, %c0_23] : memref<4x1x128xf32, #tpu.memory_space<vmem>>, vector<1x1x128xf32>
    %29 = vector.shape_cast %28 : vector<1x1x128xf32> to vector<1x128xf32>
    %cst_24 = arith.constant dense<0.000000e+00> : vector<32x128xf32>
    %30 = tpu.matmul %25, %27, %cst_24 {dimension_numbers = #tpu.dot_dimension_numbers<[1], [0], [0], [1], [0, 0, 1, 1], [], []>} : vector<32x128xbf16>, vector<128x128xbf16>, vector<32x128xf32> -> vector<32x128xf32>
    %31 = arith.truncf %30 : vector<32x128xf32> to vector<32x128xbf16>
    %cst_25 = arith.constant dense<0.000000e+00> : vector<32x128xf32>
    %32 = tpu.matmul %0, %31, %cst_25 {dimension_numbers = #tpu.dot_dimension_numbers<[1], [0], [0], [1], [0, 0, 1, 1], [], []>} : vector<32x32xbf16>, vector<32x128xbf16>, vector<32x128xf32> -> vector<32x128xf32>
    %33 = vector.broadcast %29 : vector<1x128xf32> to vector<32x128xf32>
    %34 = arith.addf %32, %33 : vector<32x128xf32>
    %cst_26 = arith.constant 0.000000e+00 : f32
    %35 = vector.broadcast %cst_26 : f32 to vector<32x128xf32>
    %36 = arith.maximumf %34, %35 : vector<32x128xf32>
    %37 = arith.truncf %36 : vector<32x128xf32> to vector<32x128xbf16>
    %c3 = arith.constant 3 : index
    %c0_27 = arith.constant 0 : index
    %c0_28 = arith.constant 0 : index
    %38 = vector.load %arg2[%c3, %c0_27, %c0_28] : memref<4x128x128xbf16, #tpu.memory_space<vmem>>, vector<1x128x128xbf16>
    %39 = vector.shape_cast %38 : vector<1x128x128xbf16> to vector<128x128xbf16>
    %c3_29 = arith.constant 3 : index
    %c0_30 = arith.constant 0 : index
    %c0_31 = arith.constant 0 : index
    %40 = vector.load %arg3[%c3_29, %c0_30, %c0_31] : memref<4x1x128xf32, #tpu.memory_space<vmem>>, vector<1x1x128xf32>
    %41 = vector.shape_cast %40 : vector<1x1x128xf32> to vector<1x128xf32>
    %cst_32 = arith.constant dense<0.000000e+00> : vector<32x128xf32>
    %42 = tpu.matmul %37, %39, %cst_32 {dimension_numbers = #tpu.dot_dimension_numbers<[1], [0], [0], [1], [0, 0, 1, 1], [], []>} : vector<32x128xbf16>, vector<128x128xbf16>, vector<32x128xf32> -> vector<32x128xf32>
    %43 = arith.truncf %42 : vector<32x128xf32> to vector<32x128xbf16>
    %cst_33 = arith.constant dense<0.000000e+00> : vector<32x128xf32>
    %44 = tpu.matmul %0, %43, %cst_33 {dimension_numbers = #tpu.dot_dimension_numbers<[1], [0], [0], [1], [0, 0, 1, 1], [], []>} : vector<32x32xbf16>, vector<32x128xbf16>, vector<32x128xf32> -> vector<32x128xf32>
    %45 = vector.broadcast %41 : vector<1x128xf32> to vector<32x128xf32>
    %46 = arith.addf %44, %45 : vector<32x128xf32>
    %c0_34 = arith.constant 0 : index
    %c0_35 = arith.constant 0 : index
    %47 = vector.load %arg4[%c0_34, %c0_35] : memref<32x128xf32, #tpu.memory_space<vmem>>, vector<32x128xf32>
    tpu.vector_store %arg4[%c0_34, %c0_35], %46 {strides = array<i32>} : memref<32x128xf32, #tpu.memory_space<vmem>>, vector<32x128xf32>,
    return
  }
}

</mosaic_0001>

<llo_original>
// kernel: net_forward.1
$region0: #{net_forward.1}
  #allocation0 [shape = 'u32[]', space=smem, size = 0x4, offset = 0x4, fixed_abs, tag = 'smem constant byte address 0x4 - core index']
  #allocation1 [shape = 'u32[144,128]{1,0:T(1,128)}', space=vmem, size = 0x12000, scoped, tag = 'internal scratch']
  %s0 = inlined_call_operand.vmem [shape: bf16[32,32], index: 0, kind: input, shape index: {}]
  %s1 = inlined_call_operand.vmem [shape: bf16[32,128], index: 1, kind: input, shape index: {}]
  %s2 = inlined_call_operand.hbm [shape: bf16[4,128,128], index: 2, kind: input, shape index: {}]
  %s3 = inlined_call_operand.vmem [shape: f32[4,1,128], index: 3, kind: input, shape index: {}]
  %s4 = inlined_call_operand.vmem [shape: f32[32,128], index: 4, kind: output, shape index: {}]
  %s5 = sld [smem:[#allocation0]]
  $region30: #{net_forward.1} parent=0
    _
  %s7 = ssub.s32 1, %s5
  %s8 = scalar_select 0, %s7, %s5
  $region1: #{net_forward.1} parent=0
    #allocation2 [shape = 'u8[131072]{0}', space=vmem, size = 0x20000, scoped, tag = 'input window, operand 2, single buffered']
    #allocation3 [shape = 's32[1]{0}', space=sflag, size = 0x4, scoped, tag = 'scoped memory for net_forward.1']
    %9 = vsyncpa [#allocation3], 0
    // Predicated region
    $region2: #{net_forward.1} parent=1 // pred_check
      _
    $region3: #{net_forward.1} parent=1 // pred_check_branch
      %11 = sbr.rel (0) target = $region5
    $region4: #{net_forward.1} parent=1 // pred_region
      _
    $region5: #{net_forward.1} parent=1 // pred_fallthru
      _
    // Predicated region
    $region6: #{net_forward.1} parent=1 // pred_check
      _
    $region7: #{net_forward.1} parent=1 // pred_check_branch
      %13 = sbr.rel (0) target = $region9
    $region8: #{net_forward.1} parent=1 // pred_region
      _
    $region9: #{net_forward.1} parent=1 // pred_fallthru
      _
    // Predicated region
    $region10: #{net_forward.1} parent=1 // pred_check
      _
    $region11: #{net_forward.1} parent=1 // pred_check_branch
      %15 = sbr.rel (0) target = $region13
    $region12: #{net_forward.1} parent=1 // pred_region
      %s17 = ssub.s32 4096, 4096
      %18 = vsyncadd [#allocation3], %s17
      %s19 = sshll.u32 [#allocation2], 4
      %s20 = int_to_ptr.vmem [resolvable:$true] %s19
      %25 = dma.hbm_to_vmem [thread:$0]  %s2, 4096, %s20, [#allocation3], 64, 64, 4
    $region13: #{net_forward.1} parent=1 // pred_fallthru
      _
    // Predicated region
    $region14: #{net_forward.1} parent=1 // pred_check
      _
    $region15: #{net_forward.1} parent=1 // pred_check_branch
      %27 = sbr.rel (0) target = $region17
    $region16: #{net_forward.1} parent=1 // pred_region
      _
    $region17: #{net_forward.1} parent=1 // pred_fallthru
      _
    // Predicated region
    $region18: #{net_forward.1} parent=1 // pred_check
      _
    $region19: #{net_forward.1} parent=1 // pred_check_branch
      %29 = sbr.rel (0) target = $region21
    $region20: #{net_forward.1} parent=1 // pred_region
      %30 = dma.done [#allocation3], 4096
    $region21: #{net_forward.1} parent=1 // pred_fallthru
      _
    %v32 = vld [vmem:[%s0] sm:$0xf]
    %v33 = vld [vmem:[%s0 + $0x4] sm:$0xf]
    %v34 = vld [vmem:[%s0 + $0x8] sm:$0xf]
    %v35 = vld [vmem:[%s0 + $0xc] sm:$0xf]
    %v36 = vld [vmem:[%s1] sm:$0xf]
    %v37 = vld [vmem:[%s1 + $0x4] sm:$0xf]
    %v38 = vld [vmem:[%s1 + $0x8] sm:$0xf]
    %v39 = vld [vmem:[%s1 + $0xc] sm:$0xf]
    %v40 = vld [vmem:[#allocation2] sm:$0xf]
    %v41 = vld [vmem:[#allocation2 + $0x4] sm:$0xf]
    %v42 = vld [vmem:[#allocation2 + $0x8] sm:$0xf]
    %v43 = vld [vmem:[#allocation2 + $0xc] sm:$0xf]
    %v44 = vld [vmem:[#allocation2 + $0x10] sm:$0xf]
    %v45 = vld [vmem:[#allocation2 + $0x14] sm:$0xf]
    %v46 = vld [vmem:[#allocation2 + $0x18] sm:$0xf]
    %v47 = vld [vmem:[#allocation2 + $0x1c] sm:$0xf]
    %v48 = vld [vmem:[#allocation2 + $0x20] sm:$0xf]
    %v49 = vld [vmem:[#allocation2 + $0x24] sm:$0xf]
    %v50 = vld [vmem:[#allocation2 + $0x28] sm:$0xf]
    %v51 = vld [vmem:[#allocation2 + $0x2c] sm:$0xf]
    %v52 = vld [vmem:[#allocation2 + $0x30] sm:$0xf]
    %v53 = vld [vmem:[#allocation2 + $0x34] sm:$0xf]
    %v54 = vld [vmem:[#allocation2 + $0x38] sm:$0xf]
    %v55 = vld [vmem:[#allocation2 + $0x3c] sm:$0xf]
    %v56 = vld [vmem:[%s3] sm:$0x1]
    %v61 = vunpack.c.l.b16 %v36
    %v62 = vunpack.c.l.b16 %v37
    %v63 = vunpack.c.l.b16 %v38
    %v64 = vunpack.c.l.b16 %v39
    %v65 = vpack.c.b16 %v62, %v61
    %v66 = vpack.c.b16 %v64, %v63
    %v85 = vunpack.c.l.b16 %v40
    %v86 = vunpack.c.l.b16 %v41
    %v87 = vunpack.c.l.b16 %v42
    %v88 = vunpack.c.l.b16 %v43
    %v89 = vunpack.c.l.b16 %v44
    %v90 = vunpack.c.l.b16 %v45
    %v91 = vunpack.c.l.b16 %v46
    %v92 = vunpack.c.l.b16 %v47
    %v93 = vunpack.c.l.b16 %v48
    %v94 = vunpack.c.l.b16 %v49
    %v95 = vunpack.c.l.b16 %v50
    %v96 = vunpack.c.l.b16 %v51
    %v97 = vunpack.c.l.b16 %v52
    %v98 = vunpack.c.l.b16 %v53
    %v99 = vunpack.c.l.b16 %v54
    %v100 = vunpack.c.l.b16 %v55
    %v101 = vpack.c.b16 %v86, %v85
    %v102 = vpack.c.b16 %v88, %v87
    %v103 = vpack.c.b16 %v90, %v89
    %v104 = vpack.c.b16 %v92, %v91
    %v105 = vpack.c.b16 %v94, %v93
    %v106 = vpack.c.b16 %v96, %v95
    %v107 = vpack.c.b16 %v98, %v97
    %v108 = vpack.c.b16 %v100, %v99
    %117 = vmatprep.subr.bf16.mxu0 0
    %118 = vmatpush1.bf16.msra.mxu0 %v108
    %119 = vmatprep.subr.bf16.mxu0 0
    %120 = vmatpush1.bf16.msra.mxu0 %v107
    %121 = vmatprep.subr.bf16.mxu0 0
    %122 = vmatpush1.bf16.msra.mxu0 %v106
    %123 = vmatprep.subr.bf16.mxu0 0
    %124 = vmatpush1.bf16.msra.mxu0 %v105
    %125 = vmatprep.subr.bf16.mxu0 0
    %126 = vmatpush1.bf16.msra.mxu0 %v104
    %127 = vmatprep.subr.bf16.mxu0 0
    %128 = vmatpush1.bf16.msra.mxu0 %v103
    %129 = vmatprep.subr.bf16.mxu0 0
    %130 = vmatpush1.bf16.msra.mxu0 %v102
    %131 = vmatprep.subr.bf16.mxu0 0
    %132 = vmatpush1.bf16.msra.mxu0 %v101
    %133 = vmatprep.subr.bf16.mxu0 0
    %134 = vmatpush2.bf16.msra.mxu0 0
    %135 = vmatprep.subr.bf16.mxu0 0
    %136 = vmatpush2.bf16.msra.mxu0 0
    %137 = vmatprep.subr.bf16.mxu0 0
    %138 = vmatpush2.bf16.msra.mxu0 0
    %139 = vmatprep.subr.bf16.mxu0 0
    %140 = vmatpush2.bf16.msra.mxu0 0
    %141 = vmatprep.subr.bf16.mxu0 0
    %142 = vmatpush2.bf16.msra.mxu0 0
    %143 = vmatprep.subr.bf16.mxu0 0
    %144 = vmatpush2.bf16.msra.mxu0 0
    %145 = vmatprep.subr.bf16.mxu0 0
    %146 = vmatpush2.bf16.msra.mxu0 0
    %147 = vmatprep.subr.bf16.mxu0 0
    %148 = vmatpush2.bf16.msra.mxu0 0
    %149 = vmatprep.mubr.bf16.mxu0 0
    %150 = vmatmul.mubr.bf16.gmra.mxu0 %v65
    %v151 = vpop.f32.mrf.mxu0
    %v152 = vadd.f32 0.0, %v151
    %v153 = vpop.f32.mrf.mxu0
    %v154 = vpop.f32.mrf.mxu0
    %v155 = vadd.f32 0.0, %v154
    %v156 = vpop.f32.mrf.mxu0
    %157 = vmatprep.mubr.bf16.mxu0 0
    %158 = vmatmul.mubr.bf16.gmra.mxu0 %v66
    %v159 = vpop.f32.mrf.mxu0
    %v160 = vadd.f32 0.0, %v159
    %v161 = vpop.f32.mrf.mxu0
    %v162 = vpop.f32.mrf.mxu0
    %v163 = vadd.f32 0.0, %v162
    %v164 = vpop.f32.mrf.mxu0
    %165 = vdwg.mxu0
    %v166 = vpack.c.bf16 %v155, %v152
    %v167 = vpack.c.bf16 %v163, %v160
    %v169 = vlaneseq
    %v170 = vshrl.u32 %v169, 7
    %v171 = vsub.s32 0, %v170
    %v172 = vrot.slane %v56, %v171
    %v178 = vunpack.c.l.b16 %v32
    %v179 = vunpack.c.l.b16 %v33
    %v180 = vunpack.c.l.b16 %v34
    %v181 = vunpack.c.l.b16 %v35
    %v182 = vpack.c.b16 %v179, %v178
    %v183 = vpack.c.b16 %v181, %v180
    %vm184 = vcmask 261120
    %v186 = vsel %vm184, %v182, 0
    %v189 = vsel %vm184, %v183, 0
    %191 = vmatprep.subr.bf16.mxu0 0
    %192 = vmatpush1.bf16.msra.mxu0 0
    %193 = vmatprep.subr.bf16.mxu0 0
    %194 = vmatpush1.bf16.msra.mxu0 0
    %195 = vmatprep.subr.bf16.mxu0 0
    %196 = vmatpush1.bf16.msra.mxu0 0
    %197 = vmatprep.subr.bf16.mxu0 0
    %198 = vmatpush1.bf16.msra.mxu0 0
    %199 = vmatprep.subr.bf16.mxu0 0
    %200 = vmatpush1.bf16.msra.mxu0 0
    %201 = vmatprep.subr.bf16.mxu0 0
    %202 = vmatpush1.bf16.msra.mxu0 0
    %203 = vmatprep.subr.bf16.mxu0 0
    %204 = vmatpush1.bf16.msra.mxu0 %v167
    %205 = vmatprep.subr.bf16.mxu0 0
    %206 = vmatpush1.bf16.msra.mxu0 %v166
    %207 = vmatprep.subr.bf16.mxu0 0
    %208 = vmatpush2.bf16.msra.mxu0 0
    %209 = vmatprep.subr.bf16.mxu0 0
    %210 = vmatpush2.bf16.msra.mxu0 0
    %211 = vmatprep.subr.bf16.mxu0 0
    %212 = vmatpush2.bf16.msra.mxu0 0
    %213 = vmatprep.subr.bf16.mxu0 0
    %214 = vmatpush2.bf16.msra.mxu0 0
    %215 = vmatprep.subr.bf16.mxu0 0
    %216 = vmatpush2.bf16.msra.mxu0 0
    %217 = vmatprep.subr.bf16.mxu0 0
    %218 = vmatpush2.bf16.msra.mxu0 0
    %219 = vmatprep.subr.bf16.mxu0 0
    %220 = vmatpush2.bf16.msra.mxu0 0
    %221 = vmatprep.subr.bf16.mxu0 0
    %222 = vmatpush2.bf16.msra.mxu0 0
    %223 = vmatprep.mubr.bf16.mxu0 0
    %224 = vmatmul.mubr.bf16.gmra.mxu0 %v186
    %v225 = vpop.f32.mrf.mxu0
    %v226 = vadd.f32 %v172, %v225
    %v227 = vpop.f32.mrf.mxu0
    %v228 = vpop.f32.mrf.mxu0
    %v229 = vadd.f32 %v172, %v228
    %v230 = vpop.f32.mrf.mxu0
    %231 = vmatprep.mubr.bf16.mxu0 0
    %232 = vmatmul.mubr.bf16.gmra.mxu0 %v189
    %v233 = vpop.f32.mrf.mxu0
    %v234 = vadd.f32 %v172, %v233
    %v235 = vpop.f32.mrf.mxu0
    %v236 = vpop.f32.mrf.mxu0
    %v237 = vadd.f32 %v172, %v236
    %v238 = vpop.f32.mrf.mxu0
    %239 = vdwg.mxu0
    %v240 = vmax.f32 %v226, 0.0
    %v241 = vmax.f32 %v229, 0.0
    %v242 = vmax.f32 %v234, 0.0
    %v243 = vmax.f32 %v237, 0.0
    %v244 = vpack.c.bf16 %v241, %v240
    %v245 = vpack.c.bf16 %v243, %v242
    %s246 = scalar_lea.vmem [#allocation2], 64
    %v247 = vld [vmem:[%s246] sm:$0xf]
    %v248 = vld [vmem:[%s246 + $0x4] sm:$0xf]
    %v249 = vld [vmem:[%s246 + $0x8] sm:$0xf]
    %v250 = vld [vmem:[%s246 + $0xc] sm:$0xf]
    %v251 = vld [vmem:[%s246 + $0x10] sm:$0xf]
    %v252 = vld [vmem:[%s246 + $0x14] sm:$0xf]
    %v253 = vld [vmem:[%s246 + $0x18] sm:$0xf]
    %v254 = vld [vmem:[%s246 + $0x1c] sm:$0xf]
    %v255 = vld [vmem:[%s246 + $0x20] sm:$0xf]
    %v256 = vld [vmem:[%s246 + $0x24] sm:$0xf]
    %v257 = vld [vmem:[%s246 + $0x28] sm:$0xf]
    %v258 = vld [vmem:[%s246 + $0x2c] sm:$0xf]
    %v259 = vld [vmem:[%s246 + $0x30] sm:$0xf]
    %v260 = vld [vmem:[%s246 + $0x34] sm:$0xf]
    %v261 = vld [vmem:[%s246 + $0x38] sm:$0xf]
    %v262 = vld [vmem:[%s246 + $0x3c] sm:$0xf]
    %s263 = scalar_lea.vmem %s3, 1
    %v264 = vld [vmem:[%s263] sm:$0x1]
    %v281 = vunpack.c.l.b16 %v247
    %v282 = vunpack.c.l.b16 %v248
    %v283 = vunpack.c.l.b16 %v249
    %v284 = vunpack.c.l.b16 %v250
    %v285 = vunpack.c.l.b16 %v251
    %v286 = vunpack.c.l.b16 %v252
    %v287 = vunpack.c.l.b16 %v253
    %v288 = vunpack.c.l.b16 %v254
    %v289 = vunpack.c.l.b16 %v255
    %v290 = vunpack.c.l.b16 %v256
    %v291 = vunpack.c.l.b16 %v257
    %v292 = vunpack.c.l.b16 %v258
    %v293 = vunpack.c.l.b16 %v259
    %v294 = vunpack.c.l.b16 %v260
    %v295 = vunpack.c.l.b16 %v261
    %v296 = vunpack.c.l.b16 %v262
    %v297 = vpack.c.b16 %v282, %v281
    %v298 = vpack.c.b16 %v284, %v283
    %v299 = vpack.c.b16 %v286, %v285
    %v300 = vpack.c.b16 %v288, %v287
    %v301 = vpack.c.b16 %v290, %v289
    %v302 = vpack.c.b16 %v292, %v291
    %v303 = vpack.c.b16 %v294, %v293
    %v304 = vpack.c.b16 %v296, %v295
    %313 = vmatprep.subr.bf16.mxu0 0
    %314 = vmatpush1.bf16.msra.mxu0 %v304
    %315 = vmatprep.subr.bf16.mxu0 0
    %316 = vmatpush1.bf16.msra.mxu0 %v303
    %317 = vmatprep.subr.bf16.mxu0 0
    %318 = vmatpush1.bf16.msra.mxu0 %v302
    %319 = vmatprep.subr.bf16.mxu0 0
    %320 = vmatpush1.bf16.msra.mxu0 %v301
    %321 = vmatprep.subr.bf16.mxu0 0
    %322 = vmatpush1.bf16.msra.mxu0 %v300
    %323 = vmatprep.subr.bf16.mxu0 0
    %324 = vmatpush1.bf16.msra.mxu0 %v299
    %325 = vmatprep.subr.bf16.mxu0 0
    %326 = vmatpush1.bf16.msra.mxu0 %v298
    %327 = vmatprep.subr.bf16.mxu0 0
    %328 = vmatpush1.bf16.msra.mxu0 %v297
    %329 = vmatprep.subr.bf16.mxu0 0
    %330 = vmatpush2.bf16.msra.mxu0 0
    %331 = vmatprep.subr.bf16.mxu0 0
    %332 = vmatpush2.bf16.msra.mxu0 0
    %333 = vmatprep.subr.bf16.mxu0 0
    %334 = vmatpush2.bf16.msra.mxu0 0
    %335 = vmatprep.subr.bf16.mxu0 0
    %336 = vmatpush2.bf16.msra.mxu0 0
    %337 = vmatprep.subr.bf16.mxu0 0
    %338 = vmatpush2.bf16.msra.mxu0 0
    %339 = vmatprep.subr.bf16.mxu0 0
    %340 = vmatpush2.bf16.msra.mxu0 0
    %341 = vmatprep.subr.bf16.mxu0 0
    %342 = vmatpush2.bf16.msra.mxu0 0
    %343 = vmatprep.subr.bf16.mxu0 0
    %344 = vmatpush2.bf16.msra.mxu0 0
    %345 = vmatprep.mubr.bf16.mxu0 0
    %346 = vmatmul.mubr.bf16.gmra.mxu0 %v244
    %v347 = vpop.f32.mrf.mxu0
    %v348 = vadd.f32 0.0, %v347
    %v349 = vpop.f32.mrf.mxu0
    %v350 = vpop.f32.mrf.mxu0
    %v351 = vadd.f32 0.0, %v350
    %v352 = vpop.f32.mrf.mxu0
    %353 = vmatprep.mubr.bf16.mxu0 0
    %354 = vmatmul.mubr.bf16.gmra.mxu0 %v245
    %v355 = vpop.f32.mrf.mxu0
    %v356 = vadd.f32 0.0, %v355
    %v357 = vpop.f32.mrf.mxu0
    %v358 = vpop.f32.mrf.mxu0
    %v359 = vadd.f32 0.0, %v358
    %v360 = vpop.f32.mrf.mxu0
    %361 = vdwg.mxu0
    %v362 = vpack.c.bf16 %v351, %v348
    %v363 = vpack.c.bf16 %v359, %v356
    %v365 = vlaneseq
    %v366 = vshrl.u32 %v365, 7
    %v367 = vsub.s32 0, %v366
    %v368 = vrot.slane %v264, %v367
    %370 = vmatprep.subr.bf16.mxu0 0
    %371 = vmatpush1.bf16.msra.mxu0 0
    %372 = vmatprep.subr.bf16.mxu0 0
    %373 = vmatpush1.bf16.msra.mxu0 0
    %374 = vmatprep.subr.bf16.mxu0 0
    %375 = vmatpush1.bf16.msra.mxu0 0
    %376 = vmatprep.subr.bf16.mxu0 0
    %377 = vmatpush1.bf16.msra.mxu0 0
    %378 = vmatprep.subr.bf16.mxu0 0
    %379 = vmatpush1.bf16.msra.mxu0 0
    %380 = vmatprep.subr.bf16.mxu0 0
    %381 = vmatpush1.bf16.msra.mxu0 0
    %382 = vmatprep.subr.bf16.mxu0 0
    %383 = vmatpush1.bf16.msra.mxu0 %v363
    %384 = vmatprep.subr.bf16.mxu0 0
    %385 = vmatpush1.bf16.msra.mxu0 %v362
    %386 = vmatprep.subr.bf16.mxu0 0
    %387 = vmatpush2.bf16.msra.mxu0 0
    %388 = vmatprep.subr.bf16.mxu0 0
    %389 = vmatpush2.bf16.msra.mxu0 0
    %390 = vmatprep.subr.bf16.mxu0 0
    %391 = vmatpush2.bf16.msra.mxu0 0
    %392 = vmatprep.subr.bf16.mxu0 0
    %393 = vmatpush2.bf16.msra.mxu0 0
    %394 = vmatprep.subr.bf16.mxu0 0
    %395 = vmatpush2.bf16.msra.mxu0 0
    %396 = vmatprep.subr.bf16.mxu0 0
    %397 = vmatpush2.bf16.msra.mxu0 0
    %398 = vmatprep.subr.bf16.mxu0 0
    %399 = vmatpush2.bf16.msra.mxu0 0
    %400 = vmatprep.subr.bf16.mxu0 0
    %401 = vmatpush2.bf16.msra.mxu0 0
    %402 = vmatprep.mubr.bf16.mxu0 0
    %403 = vmatmul.mubr.bf16.gmra.mxu0 %v186
    %v404 = vpop.f32.mrf.mxu0
    %v405 = vadd.f32 %v368, %v404
    %v406 = vpop.f32.mrf.mxu0
    %v407 = vpop.f32.mrf.mxu0
    %v408 = vadd.f32 %v368, %v407
    %v409 = vpop.f32.mrf.mxu0
    %410 = vmatprep.mubr.bf16.mxu0 0
    %411 = vmatmul.mubr.bf16.gmra.mxu0 %v189
    %v412 = vpop.f32.mrf.mxu0
    %v413 = vadd.f32 %v368, %v412
    %v414 = vpop.f32.mrf.mxu0
    %v415 = vpop.f32.mrf.mxu0
    %v416 = vadd.f32 %v368, %v415
    %v417 = vpop.f32.mrf.mxu0
    %418 = vdwg.mxu0
    %v419 = vmax.f32 %v405, 0.0
    %v420 = vmax.f32 %v408, 0.0
    %v421 = vmax.f32 %v413, 0.0
    %v422 = vmax.f32 %v416, 0.0
    %v423 = vpack.c.bf16 %v420, %v419
    %v424 = vpack.c.bf16 %v422, %v421
    %s425 = scalar_lea.vmem [#allocation2], 128
    %v426 = vld [vmem:[%s425] sm:$0xf]
    %v427 = vld [vmem:[%s425 + $0x4] sm:$0xf]
    %v428 = vld [vmem:[%s425 + $0x8] sm:$0xf]
    %v429 = vld [vmem:[%s425 + $0xc] sm:$0xf]
    %v430 = vld [vmem:[%s425 + $0x10] sm:$0xf]
    %v431 = vld [vmem:[%s425 + $0x14] sm:$0xf]
    %v432 = vld [vmem:[%s425 + $0x18] sm:$0xf]
    %v433 = vld [vmem:[%s425 + $0x1c] sm:$0xf]
    %v434 = vld [vmem:[%s425 + $0x20] sm:$0xf]
    %v435 = vld [vmem:[%s425 + $0x24] sm:$0xf]
    %v436 = vld [vmem:[%s425 + $0x28] sm:$0xf]
    %v437 = vld [vmem:[%s425 + $0x2c] sm:$0xf]
    %v438 = vld [vmem:[%s425 + $0x30] sm:$0xf]
    %v439 = vld [vmem:[%s425 + $0x34] sm:$0xf]
    %v440 = vld [vmem:[%s425 + $0x38] sm:$0xf]
    %v441 = vld [vmem:[%s425 + $0x3c] sm:$0xf]
    %s442 = scalar_lea.vmem %s3, 2
    %v443 = vld [vmem:[%s442] sm:$0x1]
    %v460 = vunpack.c.l.b16 %v426
    %v461 = vunpack.c.l.b16 %v427
    %v462 = vunpack.c.l.b16 %v428
    %v463 = vunpack.c.l.b16 %v429
    %v464 = vunpack.c.l.b16 %v430
    %v465 = vunpack.c.l.b16 %v431
    %v466 = vunpack.c.l.b16 %v432
    %v467 = vunpack.c.l.b16 %v433
    %v468 = vunpack.c.l.b16 %v434
    %v469 = vunpack.c.l.b16 %v435
    %v470 = vunpack.c.l.b16 %v436
    %v471 = vunpack.c.l.b16 %v437
    %v472 = vunpack.c.l.b16 %v438
    %v473 = vunpack.c.l.b16 %v439
    %v474 = vunpack.c.l.b16 %v440
    %v475 = vunpack.c.l.b16 %v441
    %v476 = vpack.c.b16 %v461, %v460
    %v477 = vpack.c.b16 %v463, %v462
    %v478 = vpack.c.b16 %v465, %v464
    %v479 = vpack.c.b16 %v467, %v466
    %v480 = vpack.c.b16 %v469, %v468
    %v481 = vpack.c.b16 %v471, %v470
    %v482 = vpack.c.b16 %v473, %v472
    %v483 = vpack.c.b16 %v475, %v474
    %492 = vmatprep.subr.bf16.mxu0 0
    %493 = vmatpush1.bf16.msra.mxu0 %v483
    %494 = vmatprep.subr.bf16.mxu0 0
    %495 = vmatpush1.bf16.msra.mxu0 %v482
    %496 = vmatprep.subr.bf16.mxu0 0
    %497 = vmatpush1.bf16.msra.mxu0 %v481
    %498 = vmatprep.subr.bf16.mxu0 0
    %499 = vmatpush1.bf16.msra.mxu0 %v480
    %500 = vmatprep.subr.bf16.mxu0 0
    %501 = vmatpush1.bf16.msra.mxu0 %v479
    %502 = vmatprep.subr.bf16.mxu0 0
    %503 = vmatpush1.bf16.msra.mxu0 %v478
    %504 = vmatprep.subr.bf16.mxu0 0
    %505 = vmatpush1.bf16.msra.mxu0 %v477
    %506 = vmatprep.subr.bf16.mxu0 0
    %507 = vmatpush1.bf16.msra.mxu0 %v476
    %508 = vmatprep.subr.bf16.mxu0 0
    %509 = vmatpush2.bf16.msra.mxu0 0
    %510 = vmatprep.subr.bf16.mxu0 0
    %511 = vmatpush2.bf16.msra.mxu0 0
    %512 = vmatprep.subr.bf16.mxu0 0
    %513 = vmatpush2.bf16.msra.mxu0 0
    %514 = vmatprep.subr.bf16.mxu0 0
    %515 = vmatpush2.bf16.msra.mxu0 0
    %516 = vmatprep.subr.bf16.mxu0 0
    %517 = vmatpush2.bf16.msra.mxu0 0
    %518 = vmatprep.subr.bf16.mxu0 0
    %519 = vmatpush2.bf16.msra.mxu0 0
    %520 = vmatprep.subr.bf16.mxu0 0
    %521 = vmatpush2.bf16.msra.mxu0 0
    %522 = vmatprep.subr.bf16.mxu0 0
    %523 = vmatpush2.bf16.msra.mxu0 0
    %524 = vmatprep.mubr.bf16.mxu0 0
    %525 = vmatmul.mubr.bf16.gmra.mxu0 %v423
    %v526 = vpop.f32.mrf.mxu0
    %v527 = vadd.f32 0.0, %v526
    %v528 = vpop.f32.mrf.mxu0
    %v529 = vpop.f32.mrf.mxu0
    %v530 = vadd.f32 0.0, %v529
    %v531 = vpop.f32.mrf.mxu0
    %532 = vmatprep.mubr.bf16.mxu0 0
    %533 = vmatmul.mubr.bf16.gmra.mxu0 %v424
    %v534 = vpop.f32.mrf.mxu0
    %v535 = vadd.f32 0.0, %v534
    %v536 = vpop.f32.mrf.mxu0
    %v537 = vpop.f32.mrf.mxu0
    %v538 = vadd.f32 0.0, %v537
    %v539 = vpop.f32.mrf.mxu0
    %540 = vdwg.mxu0
    %v541 = vpack.c.bf16 %v530, %v527
    %v542 = vpack.c.bf16 %v538, %v535
    %v544 = vlaneseq
    %v545 = vshrl.u32 %v544, 7
    %v546 = vsub.s32 0, %v545
    %v547 = vrot.slane %v443, %v546
    %549 = vmatprep.subr.bf16.mxu0 0
    %550 = vmatpush1.bf16.msra.mxu0 0
    %551 = vmatprep.subr.bf16.mxu0 0
    %552 = vmatpush1.bf16.msra.mxu0 0
    %553 = vmatprep.subr.bf16.mxu0 0
    %554 = vmatpush1.bf16.msra.mxu0 0
    %555 = vmatprep.subr.bf16.mxu0 0
    %556 = vmatpush1.bf16.msra.mxu0 0
    %557 = vmatprep.subr.bf16.mxu0 0
    %558 = vmatpush1.bf16.msra.mxu0 0
    %559 = vmatprep.subr.bf16.mxu0 0
    %560 = vmatpush1.bf16.msra.mxu0 0
    %561 = vmatprep.subr.bf16.mxu0 0
    %562 = vmatpush1.bf16.msra.mxu0 %v542
    %563 = vmatprep.subr.bf16.mxu0 0
    %564 = vmatpush1.bf16.msra.mxu0 %v541
    %565 = vmatprep.subr.bf16.mxu0 0
    %566 = vmatpush2.bf16.msra.mxu0 0
    %567 = vmatprep.subr.bf16.mxu0 0
    %568 = vmatpush2.bf16.msra.mxu0 0
    %569 = vmatprep.subr.bf16.mxu0 0
    %570 = vmatpush2.bf16.msra.mxu0 0
    %571 = vmatprep.subr.bf16.mxu0 0
    %572 = vmatpush2.bf16.msra.mxu0 0
    %573 = vmatprep.subr.bf16.mxu0 0
    %574 = vmatpush2.bf16.msra.mxu0 0
    %575 = vmatprep.subr.bf16.mxu0 0
    %576 = vmatpush2.bf16.msra.mxu0 0
    %577 = vmatprep.subr.bf16.mxu0 0
    %578 = vmatpush2.bf16.msra.mxu0 0
    %579 = vmatprep.subr.bf16.mxu0 0
    %580 = vmatpush2.bf16.msra.mxu0 0
    %581 = vmatprep.mubr.bf16.mxu0 0
    %582 = vmatmul.mubr.bf16.gmra.mxu0 %v186
    %v583 = vpop.f32.mrf.mxu0
    %v584 = vadd.f32 %v547, %v583
    %v585 = vpop.f32.mrf.mxu0
    %v586 = vpop.f32.mrf.mxu0
    %v587 = vadd.f32 %v547, %v586
    %v588 = vpop.f32.mrf.mxu0
    %589 = vmatprep.mubr.bf16.mxu0 0
    %590 = vmatmul.mubr.bf16.gmra.mxu0 %v189
    %v591 = vpop.f32.mrf.mxu0
    %v592 = vadd.f32 %v547, %v591
    %v593 = vpop.f32.mrf.mxu0
    %v594 = vpop.f32.mrf.mxu0
    %v595 = vadd.f32 %v547, %v594
    %v596 = vpop.f32.mrf.mxu0
    %597 = vdwg.mxu0
    %v598 = vmax.f32 %v584, 0.0
    %v599 = vmax.f32 %v587, 0.0
    %v600 = vmax.f32 %v592, 0.0
    %v601 = vmax.f32 %v595, 0.0
    %v602 = vpack.c.bf16 %v599, %v598
    %v603 = vpack.c.bf16 %v601, %v600
    %s604 = scalar_lea.vmem [#allocation2], 192
    %v605 = vld [vmem:[%s604] sm:$0xf]
    %v606 = vld [vmem:[%s604 + $0x4] sm:$0xf]
    %v607 = vld [vmem:[%s604 + $0x8] sm:$0xf]
    %v608 = vld [vmem:[%s604 + $0xc] sm:$0xf]
    %v609 = vld [vmem:[%s604 + $0x10] sm:$0xf]
    %v610 = vld [vmem:[%s604 + $0x14] sm:$0xf]
    %v611 = vld [vmem:[%s604 + $0x18] sm:$0xf]
    %v612 = vld [vmem:[%s604 + $0x1c] sm:$0xf]
    %v613 = vld [vmem:[%s604 + $0x20] sm:$0xf]
    %v614 = vld [vmem:[%s604 + $0x24] sm:$0xf]
    %v615 = vld [vmem:[%s604 + $0x28] sm:$0xf]
    %v616 = vld [vmem:[%s604 + $0x2c] sm:$0xf]
    %v617 = vld [vmem:[%s604 + $0x30] sm:$0xf]
    %v618 = vld [vmem:[%s604 + $0x34] sm:$0xf]
    %v619 = vld [vmem:[%s604 + $0x38] sm:$0xf]
    %v620 = vld [vmem:[%s604 + $0x3c] sm:$0xf]
    %s621 = scalar_lea.vmem %s3, 3
    %v622 = vld [vmem:[%s621] sm:$0x1]
    %v639 = vunpack.c.l.b16 %v605
    %v640 = vunpack.c.l.b16 %v606
    %v641 = vunpack.c.l.b16 %v607
    %v642 = vunpack.c.l.b16 %v608
    %v643 = vunpack.c.l.b16 %v609
    %v644 = vunpack.c.l.b16 %v610
    %v645 = vunpack.c.l.b16 %v611
    %v646 = vunpack.c.l.b16 %v612
    %v647 = vunpack.c.l.b16 %v613
    %v648 = vunpack.c.l.b16 %v614
    %v649 = vunpack.c.l.b16 %v615
    %v650 = vunpack.c.l.b16 %v616
    %v651 = vunpack.c.l.b16 %v617
    %v652 = vunpack.c.l.b16 %v618
    %v653 = vunpack.c.l.b16 %v619
    %v654 = vunpack.c.l.b16 %v620
    %v655 = vpack.c.b16 %v640, %v639
    %v656 = vpack.c.b16 %v642, %v641
    %v657 = vpack.c.b16 %v644, %v643
    %v658 = vpack.c.b16 %v646, %v645
    %v659 = vpack.c.b16 %v648, %v647
    %v660 = vpack.c.b16 %v650, %v649
    %v661 = vpack.c.b16 %v652, %v651
    %v662 = vpack.c.b16 %v654, %v653
    %671 = vmatprep.subr.bf16.mxu0 0
    %672 = vmatpush1.bf16.msra.mxu0 %v662
    %673 = vmatprep.subr.bf16.mxu0 0
    %674 = vmatpush1.bf16.msra.mxu0 %v661
    %675 = vmatprep.subr.bf16.mxu0 0
    %676 = vmatpush1.bf16.msra.mxu0 %v660
    %677 = vmatprep.subr.bf16.mxu0 0
    %678 = vmatpush1.bf16.msra.mxu0 %v659
    %679 = vmatprep.subr.bf16.mxu0 0
    %680 = vmatpush1.bf16.msra.mxu0 %v658
    %681 = vmatprep.subr.bf16.mxu0 0
    %682 = vmatpush1.bf16.msra.mxu0 %v657
    %683 = vmatprep.subr.bf16.mxu0 0
    %684 = vmatpush1.bf16.msra.mxu0 %v656
    %685 = vmatprep.subr.bf16.mxu0 0
    %686 = vmatpush1.bf16.msra.mxu0 %v655
    %687 = vmatprep.subr.bf16.mxu0 0
    %688 = vmatpush2.bf16.msra.mxu0 0
    %689 = vmatprep.subr.bf16.mxu0 0
    %690 = vmatpush2.bf16.msra.mxu0 0
    %691 = vmatprep.subr.bf16.mxu0 0
    %692 = vmatpush2.bf16.msra.mxu0 0
    %693 = vmatprep.subr.bf16.mxu0 0
    %694 = vmatpush2.bf16.msra.mxu0 0
    %695 = vmatprep.subr.bf16.mxu0 0
    %696 = vmatpush2.bf16.msra.mxu0 0
    %697 = vmatprep.subr.bf16.mxu0 0
    %698 = vmatpush2.bf16.msra.mxu0 0
    %699 = vmatprep.subr.bf16.mxu0 0
    %700 = vmatpush2.bf16.msra.mxu0 0
    %701 = vmatprep.subr.bf16.mxu0 0
    %702 = vmatpush2.bf16.msra.mxu0 0
    %703 = vmatprep.mubr.bf16.mxu0 0
    %704 = vmatmul.mubr.bf16.gmra.mxu0 %v602
    %v705 = vpop.f32.mrf.mxu0
    %v706 = vadd.f32 0.0, %v705
    %v707 = vpop.f32.mrf.mxu0
    %v708 = vpop.f32.mrf.mxu0
    %v709 = vadd.f32 0.0, %v708
    %v710 = vpop.f32.mrf.mxu0
    %711 = vmatprep.mubr.bf16.mxu0 0
    %712 = vmatmul.mubr.bf16.gmra.mxu0 %v603
    %v713 = vpop.f32.mrf.mxu0
    %v714 = vadd.f32 0.0, %v713
    %v715 = vpop.f32.mrf.mxu0
    %v716 = vpop.f32.mrf.mxu0
    %v717 = vadd.f32 0.0, %v716
    %v718 = vpop.f32.mrf.mxu0
    %719 = vdwg.mxu0
    %v720 = vpack.c.bf16 %v709, %v706
    %v721 = vpack.c.bf16 %v717, %v714
    %v723 = vlaneseq
    %v724 = vshrl.u32 %v723, 7
    %v725 = vsub.s32 0, %v724
    %v726 = vrot.slane %v622, %v725
    %728 = vmatprep.subr.bf16.mxu0 0
    %729 = vmatpush1.bf16.msra.mxu0 0
    %730 = vmatprep.subr.bf16.mxu0 0
    %731 = vmatpush1.bf16.msra.mxu0 0
    %732 = vmatprep.subr.bf16.mxu0 0
    %733 = vmatpush1.bf16.msra.mxu0 0
    %734 = vmatprep.subr.bf16.mxu0 0
    %735 = vmatpush1.bf16.msra.mxu0 0
    %736 = vmatprep.subr.bf16.mxu0 0
    %737 = vmatpush1.bf16.msra.mxu0 0
    %738 = vmatprep.subr.bf16.mxu0 0
    %739 = vmatpush1.bf16.msra.mxu0 0
    %740 = vmatprep.subr.bf16.mxu0 0
    %741 = vmatpush1.bf16.msra.mxu0 %v721
    %742 = vmatprep.subr.bf16.mxu0 0
    %743 = vmatpush1.bf16.msra.mxu0 %v720
    %744 = vmatprep.subr.bf16.mxu0 0
    %745 = vmatpush2.bf16.msra.mxu0 0
    %746 = vmatprep.subr.bf16.mxu0 0
    %747 = vmatpush2.bf16.msra.mxu0 0
    %748 = vmatprep.subr.bf16.mxu0 0
    %749 = vmatpush2.bf16.msra.mxu0 0
    %750 = vmatprep.subr.bf16.mxu0 0
    %751 = vmatpush2.bf16.msra.mxu0 0
    %752 = vmatprep.subr.bf16.mxu0 0
    %753 = vmatpush2.bf16.msra.mxu0 0
    %754 = vmatprep.subr.bf16.mxu0 0
    %755 = vmatpush2.bf16.msra.mxu0 0
    %756 = vmatprep.subr.bf16.mxu0 0
    %757 = vmatpush2.bf16.msra.mxu0 0
    %758 = vmatprep.subr.bf16.mxu0 0
    %759 = vmatpush2.bf16.msra.mxu0 0
    %760 = vmatprep.mubr.bf16.mxu0 0
    %761 = vmatmul.mubr.bf16.gmra.mxu0 %v186
    %v762 = vpop.f32.mrf.mxu0
    %v763 = vadd.f32 %v726, %v762
    %v764 = vpop.f32.mrf.mxu0
    %v765 = vpop.f32.mrf.mxu0
    %v766 = vadd.f32 %v726, %v765
    %v767 = vpop.f32.mrf.mxu0
    %768 = vmatprep.mubr.bf16.mxu0 0
    %769 = vmatmul.mubr.bf16.gmra.mxu0 %v189
    %v770 = vpop.f32.mrf.mxu0
    %v771 = vadd.f32 %v726, %v770
    %v772 = vpop.f32.mrf.mxu0
    %v773 = vpop.f32.mrf.mxu0
    %v774 = vadd.f32 %v726, %v773
    %v775 = vpop.f32.mrf.mxu0
    %776 = vdwg.mxu0
    %777 = vst [vmem:[%s4] sm:$0xff] %v763
    %778 = vst [vmem:[%s4 + $0x8] sm:$0xff] %v766
    %779 = vst [vmem:[%s4 + $0x10] sm:$0xff] %v771
    %780 = vst [vmem:[%s4 + $0x18] sm:$0xff] %v774
    // Predicated region
    $region22: #{net_forward.1} parent=1 // pred_check
      _
    $region23: #{net_forward.1} parent=1 // pred_check_branch
      %782 = sbr.rel (0) target = $region25
    $region24: #{net_forward.1} parent=1 // pred_region
      _
    $region25: #{net_forward.1} parent=1 // pred_fallthru
      _
    // Predicated region
    $region26: #{net_forward.1} parent=1 // pred_check
      _
    $region27: #{net_forward.1} parent=1 // pred_check_branch
      %784 = sbr.rel (0) target = $region29
    $region28: #{net_forward.1} parent=1 // pred_region
      _
    $region29: #{net_forward.1} parent=1 // pred_fallthru
      _
    %785 = vsyncpa [#allocation3], 1

</llo_original>
